<compile_context>
chip_gen: v6e
topology: v6e:2x2x1
jax: 0.10.0
libtpu: 0.0.40
codegen_flags: <defaults>
</compile_context>

<pallas_src>
import math

import jax
import jax.numpy as jnp
from jax.experimental import pallas as pl
from jax.experimental.pallas import tpu as pltpu


def identity(x: jax.Array) -> jax.Array:
    """nn.Identity forward: the fastest kernel is no kernel."""
    return x


# ----------------------------------------------------------------------------
# Optional materializing copy (debug / "caller needs a fresh buffer" path).
# ----------------------------------------------------------------------------

_MAX_DMAS_IN_FLIGHT = 4
_MIN_BYTES_PER_CHUNK = 8 * 1024 * 1024  # don't bother chunking below ~16 MiB


def _chunk_bounds(rows: int, total_bytes: int):
    """Split dim 0 into up to _MAX_DMAS_IN_FLIGHT row ranges for overlapped DMA."""
    if rows < 2 or total_bytes < 2 * _MIN_BYTES_PER_CHUNK:
        return [(0, rows)]
    n_chunks = int(min(_MAX_DMAS_IN_FLIGHT, rows,
                       total_bytes // _MIN_BYTES_PER_CHUNK))
    n_chunks = max(2, n_chunks)
    base, rem = divmod(rows, n_chunks)
    bounds, start = [], 0
    for c in range(n_chunks):
        size = base + (1 if c < rem else 0)
        if size > 0:
            bounds.append((start, start + size))
        start += size
    return bounds


def identity_copy(x: jax.Array) -> jax.Array:
    """Return a distinct HBM buffer equal to x, via Pallas HBM->HBM DMA."""
    if x.size == 0:
        return jnp.zeros(x.shape, x.dtype)

    orig_shape = x.shape
    squeeze_back = False
    if x.ndim == 0:
        x = x.reshape(1)
        squeeze_back = True

    shape = x.shape
    itemsize = jnp.dtype(x.dtype).itemsize
    total_bytes = int(math.prod(shape)) * int(itemsize)
    bounds = _chunk_bounds(shape[0], total_bytes)
    n_sems = len(bounds)

    def kernel(x_hbm, o_hbm, sem):
        copies = []
        for c, (r0, r1) in enumerate(bounds):
            copies.append(
                pltpu.make_async_copy(
                    x_hbm.at[pl.ds(r0, r1 - r0)],
                    o_hbm.at[pl.ds(r0, r1 - r0)],
                    sem.at[c],
                )
            )
        for cp in copies:   # issue all (up to 4 DMAs in flight)
            cp.start()
        for cp in copies:   # then drain
            cp.wait()

    out = pl.pallas_call(
        kernel,
        out_shape=jax.ShapeDtypeStruct(shape, x.dtype),
        in_specs=[pl.BlockSpec(memory_space=pl.ANY)],
        out_specs=pl.BlockSpec(memory_space=pl.ANY),
        scratch_shapes=[pltpu.SemaphoreType.DMA((n_sems,))],
        # Memory-only custom call: 0 flops, read + write of the array.
        cost_estimate=pl.CostEstimate(
            flops=0, transcendentals=0, bytes_accessed=2 * total_bytes
        ),
    )(x)

    return out.reshape(orig_shape) if squeeze_back else out


if __name__ == "__main__":
    key = jax.random.PRNGKey(0)
    shape = (2, 4, 16, 16)  # NCHW, small
    x = jax.random.normal(key, shape, dtype=jnp.float32)

    # Default forward path: pure pass-through, no kernel, no HBM traffic.
    y_fast = identity(x)
    assert y_fast is x

    # Debug/copy path: exercise the Pallas HBM->HBM DMA kernel once.
    y_copy = identity_copy(x)
    jax.block_until_ready(y_copy)

    assert y_copy.shape == shape, (y_copy.shape, shape)
    assert y_copy.dtype == x.dtype, (y_copy.dtype, x.dtype)
    assert bool(jnp.all(y_copy == x)), "Identity copy output mismatch"

    print("KERNEL_OK")
</pallas_src>

<mosaic_0001>
module attributes {stable_mosaic.version = 11 : i64} {
  func.func @kernel(%arg0: memref<2x4x16x16xf32, #tpu.memory_space<any>>, %arg1: memref<2x4x16x16xf32, #tpu.memory_space<any>>, %arg2: memref<1x!tpu.dma_semaphore, #tpu.memory_space<semaphore_mem>>) attributes {dimension_semantics = [], scalar_prefetch = 0 : i64, scratch_operands = 1 : i64, tpu.core_type = #tpu.core_type<tc>} {
    %c0_i32 = arith.constant 0 : i32
    %c0_i32_0 = arith.constant 0 : i32
    %c0_i32_1 = arith.constant 0 : i32
    %c0_i32_2 = arith.constant 0 : i32
    %c0_i32_3 = arith.constant 0 : i32
    %0 = tpu.memref_slice %arg0[%c0_i32_0, %c0_i32_1, %c0_i32_2, %c0_i32_3] : memref<2x4x16x16xf32, #tpu.memory_space<any>> -> memref<2x4x16x16xf32, #tpu.memory_space<any>>
    %c0_i32_4 = arith.constant 0 : i32
    %c0_i32_5 = arith.constant 0 : i32
    %c0_i32_6 = arith.constant 0 : i32
    %c0_i32_7 = arith.constant 0 : i32
    %1 = tpu.memref_slice %arg1[%c0_i32_4, %c0_i32_5, %c0_i32_6, %c0_i32_7] : memref<2x4x16x16xf32, #tpu.memory_space<any>> -> memref<2x4x16x16xf32, #tpu.memory_space<any>>
    %2 = tpu.memref_slice %arg2[%c0_i32] : memref<1x!tpu.dma_semaphore, #tpu.memory_space<semaphore_mem>> -> memref<1x!tpu.dma_semaphore, #tpu.memory_space<semaphore_mem>>
    %3 = tpu.memref_squeeze %2 : memref<1x!tpu.dma_semaphore, #tpu.memory_space<semaphore_mem>> -> memref<!tpu.dma_semaphore, #tpu.memory_space<semaphore_mem>>
    tpu.enqueue_dma source(%0 : memref<2x4x16x16xf32, #tpu.memory_space<any>>) target(%1 : memref<2x4x16x16xf32, #tpu.memory_space<any>>) target_semaphore(%3 : memref<!tpu.dma_semaphore, #tpu.memory_space<semaphore_mem>>)
    %c0_i32_8 = arith.constant 0 : i32
    %c0_i32_9 = arith.constant 0 : i32
    %c0_i32_10 = arith.constant 0 : i32
    %c0_i32_11 = arith.constant 0 : i32
    %c0_i32_12 = arith.constant 0 : i32
    %4 = tpu.memref_slice %arg0[%c0_i32_9, %c0_i32_10, %c0_i32_11, %c0_i32_12] : memref<2x4x16x16xf32, #tpu.memory_space<any>> -> memref<2x4x16x16xf32, #tpu.memory_space<any>>
    %c0_i32_13 = arith.constant 0 : i32
    %c0_i32_14 = arith.constant 0 : i32
    %c0_i32_15 = arith.constant 0 : i32
    %c0_i32_16 = arith.constant 0 : i32
    %5 = tpu.memref_slice %arg1[%c0_i32_13, %c0_i32_14, %c0_i32_15, %c0_i32_16] : memref<2x4x16x16xf32, #tpu.memory_space<any>> -> memref<2x4x16x16xf32, #tpu.memory_space<any>>
    %6 = tpu.memref_slice %arg2[%c0_i32_8] : memref<1x!tpu.dma_semaphore, #tpu.memory_space<semaphore_mem>> -> memref<1x!tpu.dma_semaphore, #tpu.memory_space<semaphore_mem>>
    %7 = tpu.memref_squeeze %6 : memref<1x!tpu.dma_semaphore, #tpu.memory_space<semaphore_mem>> -> memref<!tpu.dma_semaphore, #tpu.memory_space<semaphore_mem>>
    tpu.wait_dma2 semaphore(%7 : memref<!tpu.dma_semaphore, #tpu.memory_space<semaphore_mem>>) src(%4 : memref<2x4x16x16xf32, #tpu.memory_space<any>>) dst(%5 : memref<2x4x16x16xf32, #tpu.memory_space<any>>)
    return
  }
}

</mosaic_0001>

<llo_original>
// kernel: tpu_custom_call.1
$region0: #{tpu_custom_call.1}
  #allocation0 [shape = 'u32[]', space=smem, size = 0x4, offset = 0x4, fixed_abs, tag = 'smem constant byte address 0x4 - core index']
  #allocation1 [shape = 'u32[144,128]{1,0:T(1,128)}', space=vmem, size = 0x12000, scoped, tag = 'internal scratch']
  #allocation2 [shape = 's32[1]{0}', space=sflag, size = 0x4, scoped, tag = 'scratch operand']
  #allocation3 [shape = 's32[]', space=sflag, size = 0x4, offset = 0, fixed_abs, tag = 'sflag constant byte address 0x0 - dummy sync flag']
  #allocation4 [shape = 'u32[0]{0}', space=smem, size = 0, offset = 0, fixed_abs, tag = 'smem constant byte address 0x0 - null']
  %s0 = inlined_call_operand.hbm [shape: f32[2,4,16,16], index: 0, kind: input, shape index: {}]
  %s1 = inlined_call_operand.hbm [shape: f32[2,4,16,16], index: 1, kind: output, shape index: {}]
  %s2 = sld [smem:[#allocation0]]
  $region2: #{tpu_custom_call.1} parent=0
    _
  %s4 = ssub.s32 1, %s2
  %s5 = scalar_select 0, %s4, %s2
  %s7 = sshll.u32 1, 14
  %s8 = sxor.u32 4294967295, %s7
  %12 = dma.general %s0, 2048, %s1, [#allocation2], 131072, [#allocation4], 0, 0
  %s13 = smul.u32 2, 4
  %s14 = smul.u32 %s13, 16
  %s15 = smul.u32 %s14, 1
  %s16 = sshll.u32 %s15, 4
  %17 = dma.done [#allocation2], %s16
  %18 = vsyncmov [#allocation2]
  %s19 = vpop.sfrf %18
  %p20 = scmp.eq.s32.totalorder %s19, 0
  %p21 = pneg %p20
  %23 = shalt.err (%p21)

</llo_original>
